<compile_context>
chip_gen: v6e
topology: v6e:2x2x1
jax: 0.10.0
libtpu: 0.0.40
codegen_flags: <defaults>
</compile_context>

<pallas_src>
import functools

import jax
import jax.numpy as jnp
from jax.experimental import pallas as pl
from jax.experimental.pallas import tpu as pltpu


# ----------------------------------------------------------------------------
# Small in-kernel helpers (column-oriented MLP used by the tiled path)
# ----------------------------------------------------------------------------
def _stack2_lanes(a, b):
    """Stack two (..., 1) columns into (..., 2) via broadcast+select (robust lowering)."""
    shape = a.shape[:-1] + (2,)
    col = jax.lax.broadcasted_iota(jnp.int32, shape, len(shape) - 1)
    return jnp.where(col == 0, a, b)


def _channel_mlp(pooled, w1t_ref, b1_ref, w2t_ref, b2_ref):
    """pooled: (C, 2) = [avg | max] columns -> sigmoid(fc(avg) + fc(max)) as (C, 1).

    Column orientation: w1t is (hidden, C), w2t is (C, hidden), biases are columns.
    """
    h = jnp.dot(w1t_ref[...], pooled, preferred_element_type=jnp.float32) + b1_ref[...]
    h = jnp.maximum(h, 0.0)                                                # ReLU
    o2 = jnp.dot(w2t_ref[...], h, preferred_element_type=jnp.float32) + b2_ref[...]
    return jax.nn.sigmoid(o2[:, 0:1] + o2[:, 1:2])                         # (C, 1)


# ----------------------------------------------------------------------------
# Fused single-pass kernel: block = (bt, C, HW), full spatial plane per image
# ----------------------------------------------------------------------------
def _cab_fused_kernel(x_ref, w1_ref, b1_ref, w2_ref, b2_ref, o_ref):
    x = x_ref[...]                                   # (bt, C, HW) f32, HW lane-dense
    inv_hw = 1.0 / x.shape[-1]
    avg = jnp.sum(x, axis=-1) * inv_hw               # (bt, C)
    mx = jnp.max(x, axis=-1)                         # (bt, C)

    # Batched squeeze-excite MLP over the whole batch tile: one matmul pair per
    # pooled vector kind (avg/max) instead of an unrolled per-image loop.
    def fc(v):                                       # (bt, C) -> (bt, C)
        h = jnp.dot(v, w1_ref[...], preferred_element_type=jnp.float32) + b1_ref[...]
        h = jnp.maximum(h, 0.0)
        return jnp.dot(h, w2_ref[...], preferred_element_type=jnp.float32) + b2_ref[...]

    scale = jax.nn.sigmoid(fc(avg) + fc(mx))         # (bt, C)

    # Lane-dense store: last dim is HW (multiple of 128 for typical H*W).
    o_ref[...] = (x * scale[:, :, None]).astype(o_ref.dtype)


# ----------------------------------------------------------------------------
# Tiled two-phase kernel for large spatial planes (single pallas_call):
#   grid = (B, 2, T): phase 0 = reduce (+MLP on the last tile), phase 1 = apply.
# The per-channel scale lives in VMEM scratch between the phases.
# ----------------------------------------------------------------------------
def _cab_tiled_kernel(x_ref, w1t_ref, b1_ref, w2t_ref, b2_ref, o_ref,
                      sum_sc, max_sc, scale_sc, *, inv_hw):
    p = pl.program_id(1)                 # phase: 0 = reduce, 1 = apply
    t = pl.program_id(2)                 # HW tile index
    x = x_ref[0]                         # (C, thw)

    @pl.when((p == 0) & (t == 0))
    def _init():
        sum_sc[...] = jnp.zeros_like(sum_sc)
        max_sc[...] = jnp.full_like(max_sc, -jnp.inf)

    @pl.when(p == 0)
    def _reduce():
        sum_sc[...] += jnp.sum(x, axis=-1, keepdims=True)                  # (C, 1)
        max_sc[...] = jnp.maximum(max_sc[...], jnp.max(x, axis=-1, keepdims=True))

    @pl.when((p == 0) & (t == pl.num_programs(2) - 1))
    def _mlp():
        avg = sum_sc[...] * inv_hw
        pooled = _stack2_lanes(avg, max_sc[...])                           # (C, 2)
        scale_sc[...] = _channel_mlp(pooled, w1t_ref, b1_ref, w2t_ref, b2_ref)

    @pl.when(p == 1)
    def _apply():
        # (C, thw) * (C, 1) -> lane broadcast; lane-dense store (thw % 128 == 0).
        o_ref[0] = (x * scale_sc[...]).astype(o_ref.dtype)


# ----------------------------------------------------------------------------
# Host-side tiling helpers
# ----------------------------------------------------------------------------
def _largest_divisor_le(n, k):
    k = max(1, min(n, k))
    while n % k != 0:
        k -= 1
    return k


def _pick_hw_tile(hw, c, itemsize, budget_bytes):
    """Largest multiple-of-128 divisor of hw whose (C, thw) tile fits the budget."""
    if hw % 128 != 0:
        return None
    best = None
    t = 128
    while t <= hw:
        if hw % t == 0 and c * t * itemsize <= budget_bytes:
            best = t
        t += 128
    return best


def _tpu_vmem_and_cores():
    """(physical VMEM bytes per TensorCore, TensorCores per chip) with safe fallbacks."""
    vmem_cap = 64 * 1024 * 1024        # conservative fallback (v7x per-TC VMEM)
    num_tc = 1
    try:
        vmem_cap = int(pltpu.get_tpu_info().vmem_capacity_bytes)
    except Exception:
        pass
    try:
        kind = jax.devices()[0].device_kind.lower()
        if "7" in kind:                # v7x: 2 TensorCores per chip; v5e/v6e: 1
            num_tc = 2
    except Exception:
        pass
    return vmem_cap, num_tc


# ----------------------------------------------------------------------------
# Public wrapper (NCHW in / NCHW out, weights in nn.Linear.weight.T convention)
# ----------------------------------------------------------------------------
def cab_forward(x_nchw, w1, b1, w2, b2, *,
                max_fused_plane_bytes=None,
                hw_tile_budget_bytes=None):
    """x_nchw: (B, C, H, W) f32.  w1: (C, hidden), b1: (hidden,), w2: (hidden, C), b2: (C,)."""
    B, C, H, W = x_nchw.shape
    HW = H * W
    hidden = w1.shape[1]
    itemsize = jnp.dtype(x_nchw.dtype).itemsize

    # Generation-aware VMEM budget: ~80% of physical (128 MiB v5e/v6e, 64 MiB v7x)
    # instead of the 32 MiB scoped default, which capped every other knob.
    vmem_cap, num_tc = _tpu_vmem_and_cores()
    vmem_limit = max(32 * 1024 * 1024, int(vmem_cap * 0.8))

    # Fused path double-buffers both its input and output block (~4 * bt * plane
    # bytes live), so with bt >= 1 any plane up to ~vmem_limit/4 can stay fused
    # (2x HBM traffic) instead of taking the 3x-traffic tiled path.
    if max_fused_plane_bytes is None:
        max_fused_plane_bytes = vmem_limit // 4
    # HW tiles for the tiled path: bigger tiles amortize the ~0.35us/step overhead.
    # 8 MiB on 128-MiB-VMEM chips (v5e/v6e), 4 MiB on v7x (4*tile live in the call).
    if hw_tile_budget_bytes is None:
        hw_tile_budget_bytes = (8 if vmem_cap >= 96 * 1024 * 1024 else 4) * 1024 * 1024

    # Pure reshapes only — no NCHW<->NHWC transposes.
    x = x_nchw.reshape(B, C, HW)

    plane_bytes = C * HW * itemsize
    thw = _pick_hw_tile(HW, C, itemsize, hw_tile_budget_bytes)

    if plane_bytes <= max_fused_plane_bytes or thw is None:
        # TODO(synk): if HW is not a multiple of 128 and the plane is very large,
        # this fused fallback may still exceed the VMEM limit; ragged-HW tiling
        # (masked partial tiles) is not implemented.
        b1r = b1.reshape(1, hidden)
        b2r = b2.reshape(1, C)

        # Batch tile sized from the VMEM budget (4 * bt * plane live), snapped to
        # a divisor of B.
        bt = min(B, max(1, vmem_limit // (4 * max(plane_bytes, 1))))
        bt = _largest_divisor_le(B, bt)
        # Only shrink the batch tile to expose multiple grid steps when the chip
        # actually has >1 TensorCore (v7x); on v5e/v6e the grid is a serial loop
        # and extra steps are pure overhead.
        if num_tc > 1 and bt > 1 and (B // bt) < num_tc:
            bt = _largest_divisor_le(B, max(1, bt // num_tc))

        out = pl.pallas_call(
            _cab_fused_kernel,
            out_shape=jax.ShapeDtypeStruct((B, C, HW), x.dtype),
            grid_spec=pltpu.PrefetchScalarGridSpec(
                num_scalar_prefetch=0,
                grid=(B // bt,),
                in_specs=[
                    pl.BlockSpec((bt, C, HW), lambda i: (i, 0, 0)),
                    pl.BlockSpec((C, hidden), lambda i: (0, 0)),
                    pl.BlockSpec((1, hidden), lambda i: (0, 0)),
                    pl.BlockSpec((hidden, C), lambda i: (0, 0)),
                    pl.BlockSpec((1, C), lambda i: (0, 0)),
                ],
                out_specs=pl.BlockSpec((bt, C, HW), lambda i: (i, 0, 0)),
            ),
            compiler_params=pltpu.CompilerParams(
                dimension_semantics=("parallel",),
                vmem_limit_bytes=vmem_limit),
        )(x, w1, b1r, w2, b2r)
    else:
        # Single two-phase call: phase 0 accumulates per-channel sum/max across HW
        # tiles and computes the sigmoid scale into VMEM scratch; phase 1 applies it.
        # TODO(synk): on v7x with B < 2 only one TensorCore streams data; splitting
        # the HW axis across the two cores would need per-core partial accumulators
        # plus a combine step and is not implemented here.
        w1t = jnp.transpose(w1)          # (hidden, C)   (tiny)
        w2t = jnp.transpose(w2)          # (C, hidden)
        b1c = b1.reshape(hidden, 1)
        b2c = b2.reshape(C, 1)
        T = HW // thw

        out = pl.pallas_call(
            functools.partial(_cab_tiled_kernel, inv_hw=1.0 / HW),
            out_shape=jax.ShapeDtypeStruct((B, C, HW), x.dtype),
            grid_spec=pltpu.PrefetchScalarGridSpec(
                num_scalar_prefetch=0,
                grid=(B, 2, T),          # (batch, phase 0=reduce/1=apply, HW tile)
                in_specs=[
                    pl.BlockSpec((1, C, thw), lambda b, p, t: (b, 0, t)),
                    pl.BlockSpec((hidden, C), lambda b, p, t: (0, 0)),
                    pl.BlockSpec((hidden, 1), lambda b, p, t: (0, 0)),
                    pl.BlockSpec((C, hidden), lambda b, p, t: (0, 0)),
                    pl.BlockSpec((C, 1), lambda b, p, t: (0, 0)),
                ],
                # Phase 0 parks the output window on tile 0 (never flushed until
                # phase 1 step 0 writes it); phase 1 walks and stores every tile.
                out_specs=pl.BlockSpec((1, C, thw), lambda b, p, t: (b, 0, p * t)),
                scratch_shapes=[pltpu.VMEM((C, 1), jnp.float32),   # running sum
                                pltpu.VMEM((C, 1), jnp.float32),   # running max
                                pltpu.VMEM((C, 1), jnp.float32)],  # sigmoid scale
            ),
            # NOTE: the phase and HW-tile axes MUST stay "arbitrary": the scratch
            # accumulators / scale carry state across those steps. Only B is parallel.
            compiler_params=pltpu.CompilerParams(
                dimension_semantics=("parallel", "arbitrary", "arbitrary"),
                vmem_limit_bytes=vmem_limit),
        )(x, w1t, b1c, w2t, b2c)

    return out.reshape(B, C, H, W)


def cab_reference(x_nchw, w1, b1, w2, b2):
    """Pure-JAX reference matching the PyTorch forward (NCHW)."""
    avg = jnp.mean(x_nchw, axis=(2, 3))          # (B, C)
    mx = jnp.max(x_nchw, axis=(2, 3))            # (B, C)

    def fc(v):
        return jnp.maximum(v @ w1 + b1, 0.0) @ w2 + b2

    out = jax.nn.sigmoid(fc(avg) + fc(mx))       # (B, C)
    return x_nchw * out[:, :, None, None]


if __name__ == "__main__":
    # Small shapes consistent with the module (reduction_ratio=16 needs C >= 16).
    B, C, H, W = 4, 32, 16, 16
    reduction_ratio = 16
    hidden = C // reduction_ratio

    key = jax.random.PRNGKey(0)
    kx, k1, k2, k3, k4 = jax.random.split(key, 5)

    x = jax.random.normal(kx, (B, C, H, W), dtype=jnp.float32)
    w1 = jax.random.normal(k1, (C, hidden), dtype=jnp.float32) * 0.1   # Linear(C, C//r).weight.T
    b1 = jax.random.normal(k2, (hidden,), dtype=jnp.float32) * 0.1
    w2 = jax.random.normal(k3, (hidden, C), dtype=jnp.float32) * 0.1   # Linear(C//r, C).weight.T
    b2 = jax.random.normal(k4, (C,), dtype=jnp.float32) * 0.1

    y_ref = jax.block_until_ready(cab_reference(x, w1, b1, w2, b2))

    # Fused single-pass path (default for small spatial planes).
    y = jax.block_until_ready(cab_forward(x, w1, b1, w2, b2))
    assert y.shape == (B, C, H, W)
    assert jnp.allclose(y, y_ref, atol=1e-5, rtol=1e-5), "fused path mismatch vs reference"

    # Force the tiled two-phase path (reduce+apply in one call) to verify it as well.
    y2 = jax.block_until_ready(
        cab_forward(x, w1, b1, w2, b2,
                    max_fused_plane_bytes=0,
                    hw_tile_budget_bytes=16 * 1024))
    assert jnp.allclose(y2, y_ref, atol=1e-5, rtol=1e-5), "tiled path mismatch vs reference"

    print("KERNEL_OK")
</pallas_src>

<mosaic_0001>
module attributes {stable_mosaic.version = 11 : i64} {
  func.func @_cab_fused_kernel(%arg0: i32, %arg1: memref<4x32x256xf32, #tpu.memory_space<vmem>>, %arg2: memref<32x2xf32, #tpu.memory_space<vmem>>, %arg3: memref<1x2xf32, #tpu.memory_space<vmem>>, %arg4: memref<2x32xf32, #tpu.memory_space<vmem>>, %arg5: memref<1x32xf32, #tpu.memory_space<vmem>>, %arg6: memref<4x32x256xf32, #tpu.memory_space<vmem>>) attributes {dimension_semantics = [#tpu.dimension_semantics<parallel>], iteration_bounds = array<i64: 1>, scalar_prefetch = 0 : i64, scratch_operands = 0 : i64, tpu.core_type = #tpu.core_type<tc>, window_params = [{transform_indices = @transform_0, window_bounds = array<i64: 4, 32, 256>}, {pipeline_mode = #tpu.pipeline_mode<synchronous>, transform_indices = @transform_1, window_bounds = array<i64: 32, 2>}, {pipeline_mode = #tpu.pipeline_mode<synchronous>, transform_indices = @transform_2, window_bounds = array<i64: 1, 2>}, {pipeline_mode = #tpu.pipeline_mode<synchronous>, transform_indices = @transform_3, window_bounds = array<i64: 2, 32>}, {pipeline_mode = #tpu.pipeline_mode<synchronous>, transform_indices = @transform_4, window_bounds = array<i64: 1, 32>}, {transform_indices = @transform_5, window_bounds = array<i64: 4, 32, 256>}]} {
    %c0 = arith.constant 0 : index
    %c0_0 = arith.constant 0 : index
    %c0_1 = arith.constant 0 : index
    %0 = vector.load %arg1[%c0, %c0_0, %c0_1] : memref<4x32x256xf32, #tpu.memory_space<vmem>>, vector<4x32x256xf32>
    %cst = arith.constant dense<0.000000e+00> : vector<4x32xf32>
    %1 = vector.multi_reduction <add>, %0, %cst [2] : vector<4x32x256xf32> to vector<4x32xf32>
    %cst_2 = arith.constant 3.906250e-03 : f32
    %2 = vector.broadcast %cst_2 : f32 to vector<4x32xf32>
    %3 = arith.mulf %1, %2 : vector<4x32xf32>
    %cst_3 = arith.constant dense<0xFF800000> : vector<4x32xf32>
    %4 = vector.multi_reduction <maximumf>, %0, %cst_3 [2] : vector<4x32x256xf32> to vector<4x32xf32>
    %c0_4 = arith.constant 0 : index
    %c0_5 = arith.constant 0 : index
    %5 = vector.load %arg2[%c0_4, %c0_5] : memref<32x2xf32, #tpu.memory_space<vmem>>, vector<32x2xf32>
    %cst_6 = arith.constant dense<0.000000e+00> : vector<4x2xf32>
    %6 = tpu.matmul %3, %5, %cst_6 {dimension_numbers = #tpu.dot_dimension_numbers<[1], [0], [0], [1], [0, 0, 1, 1], [], []>} : vector<4x32xf32>, vector<32x2xf32>, vector<4x2xf32> -> vector<4x2xf32>
    %c0_7 = arith.constant 0 : index
    %c0_8 = arith.constant 0 : index
    %7 = vector.load %arg3[%c0_7, %c0_8] : memref<1x2xf32, #tpu.memory_space<vmem>>, vector<1x2xf32>
    %8 = vector.broadcast %7 : vector<1x2xf32> to vector<4x2xf32>
    %9 = arith.addf %6, %8 : vector<4x2xf32>
    %cst_9 = arith.constant 0.000000e+00 : f32
    %10 = vector.broadcast %cst_9 : f32 to vector<4x2xf32>
    %11 = arith.maximumf %9, %10 : vector<4x2xf32>
    %c0_10 = arith.constant 0 : index
    %c0_11 = arith.constant 0 : index
    %12 = vector.load %arg4[%c0_10, %c0_11] : memref<2x32xf32, #tpu.memory_space<vmem>>, vector<2x32xf32>
    %cst_12 = arith.constant dense<0.000000e+00> : vector<4x32xf32>
    %13 = tpu.matmul %11, %12, %cst_12 {dimension_numbers = #tpu.dot_dimension_numbers<[1], [0], [0], [1], [0, 0, 1, 1], [], []>} : vector<4x2xf32>, vector<2x32xf32>, vector<4x32xf32> -> vector<4x32xf32>
    %c0_13 = arith.constant 0 : index
    %c0_14 = arith.constant 0 : index
    %14 = vector.load %arg5[%c0_13, %c0_14] : memref<1x32xf32, #tpu.memory_space<vmem>>, vector<1x32xf32>
    %15 = vector.broadcast %14 : vector<1x32xf32> to vector<4x32xf32>
    %16 = arith.addf %13, %15 : vector<4x32xf32>
    %c0_15 = arith.constant 0 : index
    %c0_16 = arith.constant 0 : index
    %17 = vector.load %arg2[%c0_15, %c0_16] : memref<32x2xf32, #tpu.memory_space<vmem>>, vector<32x2xf32>
    %cst_17 = arith.constant dense<0.000000e+00> : vector<4x2xf32>
    %18 = tpu.matmul %4, %17, %cst_17 {dimension_numbers = #tpu.dot_dimension_numbers<[1], [0], [0], [1], [0, 0, 1, 1], [], []>} : vector<4x32xf32>, vector<32x2xf32>, vector<4x2xf32> -> vector<4x2xf32>
    %c0_18 = arith.constant 0 : index
    %c0_19 = arith.constant 0 : index
    %19 = vector.load %arg3[%c0_18, %c0_19] : memref<1x2xf32, #tpu.memory_space<vmem>>, vector<1x2xf32>
    %20 = vector.broadcast %19 : vector<1x2xf32> to vector<4x2xf32>
    %21 = arith.addf %18, %20 : vector<4x2xf32>
    %cst_20 = arith.constant 0.000000e+00 : f32
    %22 = vector.broadcast %cst_20 : f32 to vector<4x2xf32>
    %23 = arith.maximumf %21, %22 : vector<4x2xf32>
    %c0_21 = arith.constant 0 : index
    %c0_22 = arith.constant 0 : index
    %24 = vector.load %arg4[%c0_21, %c0_22] : memref<2x32xf32, #tpu.memory_space<vmem>>, vector<2x32xf32>
    %cst_23 = arith.constant dense<0.000000e+00> : vector<4x32xf32>
    %25 = tpu.matmul %23, %24, %cst_23 {dimension_numbers = #tpu.dot_dimension_numbers<[1], [0], [0], [1], [0, 0, 1, 1], [], []>} : vector<4x2xf32>, vector<2x32xf32>, vector<4x32xf32> -> vector<4x32xf32>
    %c0_24 = arith.constant 0 : index
    %c0_25 = arith.constant 0 : index
    %26 = vector.load %arg5[%c0_24, %c0_25] : memref<1x32xf32, #tpu.memory_space<vmem>>, vector<1x32xf32>
    %27 = vector.broadcast %26 : vector<1x32xf32> to vector<4x32xf32>
    %28 = arith.addf %25, %27 : vector<4x32xf32>
    %29 = arith.addf %16, %28 : vector<4x32xf32>
    %30 = arith.negf %29 : vector<4x32xf32>
    %31 = math.exp %30 : vector<4x32xf32>
    %cst_26 = arith.constant 1.000000e+00 : f32
    %32 = vector.broadcast %cst_26 : f32 to vector<4x32xf32>
    %33 = arith.addf %32, %31 : vector<4x32xf32>
    %34 = arith.divf %32, %33 : vector<4x32xf32>
    %35 = vector.shape_cast %34 : vector<4x32xf32> to vector<4x32x1xf32>
    %36 = vector.broadcast %35 : vector<4x32x1xf32> to vector<4x32x256xf32>
    %37 = arith.mulf %0, %36 : vector<4x32x256xf32>
    %c0_27 = arith.constant 0 : index
    %c0_28 = arith.constant 0 : index
    %c0_29 = arith.constant 0 : index
    %38 = vector.load %arg6[%c0_27, %c0_28, %c0_29] : memref<4x32x256xf32, #tpu.memory_space<vmem>>, vector<4x32x256xf32>
    tpu.vector_store %arg6[%c0_27, %c0_28, %c0_29], %37 {strides = array<i32>} : memref<4x32x256xf32, #tpu.memory_space<vmem>>, vector<4x32x256xf32>,
    return
  }
  func.func @transform_0(%arg0: i32) -> (i32, i32, i32) {
    %c0_i32 = arith.constant 0 : i32
    %c0_i32_0 = arith.constant 0 : i32
    %c0_i32_1 = arith.constant 0 : i32
    return %arg0, %c0_i32, %c0_i32_0 : i32, i32, i32
  }
  func.func @transform_1(%arg0: i32) -> (i32, i32) {
    %c0_i32 = arith.constant 0 : i32
    %c0_i32_0 = arith.constant 0 : i32
    %c0_i32_1 = arith.constant 0 : i32
    return %c0_i32, %c0_i32_0 : i32, i32
  }
  func.func @transform_2(%arg0: i32) -> (i32, i32) {
    %c0_i32 = arith.constant 0 : i32
    %c0_i32_0 = arith.constant 0 : i32
    %c0_i32_1 = arith.constant 0 : i32
    return %c0_i32, %c0_i32_0 : i32, i32
  }
  func.func @transform_3(%arg0: i32) -> (i32, i32) {
    %c0_i32 = arith.constant 0 : i32
    %c0_i32_0 = arith.constant 0 : i32
    %c0_i32_1 = arith.constant 0 : i32
    return %c0_i32, %c0_i32_0 : i32, i32
  }
  func.func @transform_4(%arg0: i32) -> (i32, i32) {
    %c0_i32 = arith.constant 0 : i32
    %c0_i32_0 = arith.constant 0 : i32
    %c0_i32_1 = arith.constant 0 : i32
    return %c0_i32, %c0_i32_0 : i32, i32
  }
  func.func @transform_5(%arg0: i32) -> (i32, i32, i32) {
    %c0_i32 = arith.constant 0 : i32
    %c0_i32_0 = arith.constant 0 : i32
    %c0_i32_1 = arith.constant 0 : i32
    return %arg0, %c0_i32, %c0_i32_0 : i32, i32, i32
  }
}

</mosaic_0001>

<llo_original>
// kernel: tpu_custom_call.1
$region0: #{tpu_custom_call.1}
  #allocation0 [shape = 'u32[]', space=smem, size = 0x4, offset = 0x4, fixed_abs, tag = 'smem constant byte address 0x4 - core index']
  #allocation1 [shape = 'u32[144,128]{1,0:T(1,128)}', space=vmem, size = 0x12000, scoped, tag = 'internal scratch']
  %s0 = inlined_call_operand.hbm [shape: f32[4,32,256], index: 0, kind: input, shape index: {}]
  %s1 = inlined_call_operand.vmem [shape: f32[32,2], index: 1, kind: input, shape index: {}]
  %s2 = inlined_call_operand.vmem [shape: f32[1,2], index: 2, kind: input, shape index: {}]
  %s3 = inlined_call_operand.vmem [shape: f32[2,32], index: 3, kind: input, shape index: {}]
  %s4 = inlined_call_operand.vmem [shape: f32[1,32], index: 4, kind: input, shape index: {}]
  %s5 = inlined_call_operand.hbm [shape: f32[4,32,256], index: 5, kind: output, shape index: {}]
  %s6 = sld [smem:[#allocation0]]
  $region34: #{tpu_custom_call.1} parent=0
    _
  %s8 = ssub.s32 1, %s6
  %s9 = scalar_select 0, %s8, %s6
  $region1: #{tpu_custom_call.1} parent=0
    #allocation2 [shape = 'u8[131072]{0}', space=vmem, size = 0x20000, scoped, tag = 'input window, operand 0, single buffered']
    #allocation3 [shape = 's32[1]{0}', space=sflag, size = 0x4, scoped, tag = 'scoped memory for tpu_custom_call.1']
    #allocation4 [shape = 's32[1]{0}', space=sflag, size = 0x4, scoped, tag = 'scoped memory for tpu_custom_call.1']
    #allocation5 [shape = 'u8[131072]{0}', space=vmem, size = 0x20000, scoped, tag = 'output window, operand 0, single buffered']
    %10 = vsyncpa [#allocation3], 0
    %11 = vsyncpa [#allocation4], 0
    // Predicated region
    $region2: #{tpu_custom_call.1} parent=1 // pred_check
      _
    $region3: #{tpu_custom_call.1} parent=1 // pred_check_branch
      %13 = sbr.rel (0) target = $region5
    $region4: #{tpu_custom_call.1} parent=1 // pred_region
      %s15 = ssub.s32 4096, 4096
      %16 = vsyncadd [#allocation3], %s15
      %s17 = sshll.u32 [#allocation2], 4
      %s18 = int_to_ptr.vmem [resolvable:$true] %s17
      %23 = dma.hbm_to_vmem [thread:$0]  %s0, 4096, %s18, [#allocation3], 256, 256, 16
    $region5: #{tpu_custom_call.1} parent=1 // pred_fallthru
      _
    // Predicated region
    $region6: #{tpu_custom_call.1} parent=1 // pred_check
      _
    $region7: #{tpu_custom_call.1} parent=1 // pred_check_branch
      %25 = sbr.rel (0) target = $region9
    $region8: #{tpu_custom_call.1} parent=1 // pred_region
      _
    $region9: #{tpu_custom_call.1} parent=1 // pred_fallthru
      _
    // Predicated region
    $region10: #{tpu_custom_call.1} parent=1 // pred_check
      _
    $region11: #{tpu_custom_call.1} parent=1 // pred_check_branch
      %27 = sbr.rel (0) target = $region13
    $region12: #{tpu_custom_call.1} parent=1 // pred_region
      _
    $region13: #{tpu_custom_call.1} parent=1 // pred_fallthru
      _
    // Predicated region
    $region14: #{tpu_custom_call.1} parent=1 // pred_check
      _
    $region15: #{tpu_custom_call.1} parent=1 // pred_check_branch
      %29 = sbr.rel (0) target = $region17
    $region16: #{tpu_custom_call.1} parent=1 // pred_region
      _
    $region17: #{tpu_custom_call.1} parent=1 // pred_fallthru
      _
    // Predicated region
    $region18: #{tpu_custom_call.1} parent=1 // pred_check
      _
    $region19: #{tpu_custom_call.1} parent=1 // pred_check_branch
      %31 = sbr.rel (0) target = $region21
    $region20: #{tpu_custom_call.1} parent=1 // pred_region
      _
    $region21: #{tpu_custom_call.1} parent=1 // pred_fallthru
      _
    // Predicated region
    $region22: #{tpu_custom_call.1} parent=1 // pred_check
      _
    $region23: #{tpu_custom_call.1} parent=1 // pred_check_branch
      %33 = sbr.rel (0) target = $region25
    $region24: #{tpu_custom_call.1} parent=1 // pred_region
      %34 = dma.done [#allocation3], 4096
    $region25: #{tpu_custom_call.1} parent=1 // pred_fallthru
      _
    %v35 = vld [vmem:[#allocation2] sm:$0xff]
    %v36 = vld [vmem:[#allocation2 + $0x8] sm:$0xff]
    %v37 = vld [vmem:[#allocation2 + $0x10] sm:$0xff]
    %v38 = vld [vmem:[#allocation2 + $0x18] sm:$0xff]
    %v39 = vld [vmem:[#allocation2 + $0x20] sm:$0xff]
    %v40 = vld [vmem:[#allocation2 + $0x28] sm:$0xff]
    %v41 = vld [vmem:[#allocation2 + $0x30] sm:$0xff]
    %v42 = vld [vmem:[#allocation2 + $0x38] sm:$0xff]
    %v43 = vld [vmem:[#allocation2 + $0x40] sm:$0xff]
    %v44 = vld [vmem:[#allocation2 + $0x48] sm:$0xff]
    %v45 = vld [vmem:[#allocation2 + $0x50] sm:$0xff]
    %v46 = vld [vmem:[#allocation2 + $0x58] sm:$0xff]
    %v47 = vld [vmem:[#allocation2 + $0x60] sm:$0xff]
    %v48 = vld [vmem:[#allocation2 + $0x68] sm:$0xff]
    %v49 = vld [vmem:[#allocation2 + $0x70] sm:$0xff]
    %v50 = vld [vmem:[#allocation2 + $0x78] sm:$0xff]
    %v51 = vld [vmem:[#allocation2 + $0x80] sm:$0xff]
    %v52 = vld [vmem:[#allocation2 + $0x88] sm:$0xff]
    %v53 = vld [vmem:[#allocation2 + $0x90] sm:$0xff]
    %v54 = vld [vmem:[#allocation2 + $0x98] sm:$0xff]
    %v55 = vld [vmem:[#allocation2 + $0xa0] sm:$0xff]
    %v56 = vld [vmem:[#allocation2 + $0xa8] sm:$0xff]
    %v57 = vld [vmem:[#allocation2 + $0xb0] sm:$0xff]
    %v58 = vld [vmem:[#allocation2 + $0xb8] sm:$0xff]
    %v59 = vld [vmem:[#allocation2 + $0xc0] sm:$0xff]
    %v60 = vld [vmem:[#allocation2 + $0xc8] sm:$0xff]
    %v61 = vld [vmem:[#allocation2 + $0xd0] sm:$0xff]
    %v62 = vld [vmem:[#allocation2 + $0xd8] sm:$0xff]
    %v63 = vld [vmem:[#allocation2 + $0xe0] sm:$0xff]
    %v64 = vld [vmem:[#allocation2 + $0xe8] sm:$0xff]
    %v65 = vld [vmem:[#allocation2 + $0xf0] sm:$0xff]
    %v66 = vld [vmem:[#allocation2 + $0xf8] sm:$0xff]
    %v67 = vadd.f32 %v35, %v36
    %68 = vadd.xlane.f32.xlu0 %v67
    %v69 = vpop.xlane.xlu0 %68
    %v70 = vadd.f32 %v37, %v38
    %71 = vadd.xlane.f32.xlu0 %v70
    %v72 = vpop.xlane.xlu0 %71
    %v73 = vadd.f32 %v39, %v40
    %74 = vadd.xlane.f32.xlu0 %v73
    %v75 = vpop.xlane.xlu0 %74
    %v76 = vadd.f32 %v41, %v42
    %77 = vadd.xlane.f32.xlu0 %v76
    %v78 = vpop.xlane.xlu0 %77
    %v79 = vadd.f32 %v43, %v44
    %80 = vadd.xlane.f32.xlu0 %v79
    %v81 = vpop.xlane.xlu0 %80
    %v82 = vadd.f32 %v45, %v46
    %83 = vadd.xlane.f32.xlu0 %v82
    %v84 = vpop.xlane.xlu0 %83
    %v85 = vadd.f32 %v47, %v48
    %86 = vadd.xlane.f32.xlu0 %v85
    %v87 = vpop.xlane.xlu0 %86
    %v88 = vadd.f32 %v49, %v50
    %89 = vadd.xlane.f32.xlu0 %v88
    %v90 = vpop.xlane.xlu0 %89
    %v91 = vadd.f32 %v51, %v52
    %92 = vadd.xlane.f32.xlu0 %v91
    %v93 = vpop.xlane.xlu0 %92
    %v94 = vadd.f32 %v53, %v54
    %95 = vadd.xlane.f32.xlu0 %v94
    %v96 = vpop.xlane.xlu0 %95
    %v97 = vadd.f32 %v55, %v56
    %98 = vadd.xlane.f32.xlu0 %v97
    %v99 = vpop.xlane.xlu0 %98
    %v100 = vadd.f32 %v57, %v58
    %101 = vadd.xlane.f32.xlu0 %v100
    %v102 = vpop.xlane.xlu0 %101
    %v103 = vadd.f32 %v59, %v60
    %104 = vadd.xlane.f32.xlu0 %v103
    %v105 = vpop.xlane.xlu0 %104
    %v106 = vadd.f32 %v61, %v62
    %107 = vadd.xlane.f32.xlu0 %v106
    %v108 = vpop.xlane.xlu0 %107
    %v109 = vadd.f32 %v63, %v64
    %110 = vadd.xlane.f32.xlu0 %v109
    %v111 = vpop.xlane.xlu0 %110
    %v112 = vadd.f32 %v65, %v66
    %113 = vadd.xlane.f32.xlu0 %v112
    %v114 = vpop.xlane.xlu0 %113
    %v115 = vmul.f32 %v69, 0.00390625
    %v116 = vmul.f32 %v72, 0.00390625
    %v117 = vmul.f32 %v75, 0.00390625
    %v118 = vmul.f32 %v78, 0.00390625
    %v119 = vmul.f32 %v81, 0.00390625
    %v120 = vmul.f32 %v84, 0.00390625
    %v121 = vmul.f32 %v87, 0.00390625
    %v122 = vmul.f32 %v90, 0.00390625
    %v123 = vmul.f32 %v93, 0.00390625
    %v124 = vmul.f32 %v96, 0.00390625
    %v125 = vmul.f32 %v99, 0.00390625
    %v126 = vmul.f32 %v102, 0.00390625
    %v127 = vmul.f32 %v105, 0.00390625
    %v128 = vmul.f32 %v108, 0.00390625
    %v129 = vmul.f32 %v111, 0.00390625
    %v130 = vmul.f32 %v114, 0.00390625
    %v131 = vmax.f32 %v35, %v36
    %132 = vmax.xlane.f32.xlu0 %v131
    %v133 = vpop.xlane.xlu0 %132
    %v134 = vmax.f32 %v37, %v38
    %135 = vmax.xlane.f32.xlu0 %v134
    %v136 = vpop.xlane.xlu0 %135
    %v137 = vmax.f32 %v39, %v40
    %138 = vmax.xlane.f32.xlu0 %v137
    %v139 = vpop.xlane.xlu0 %138
    %v140 = vmax.f32 %v41, %v42
    %141 = vmax.xlane.f32.xlu0 %v140
    %v142 = vpop.xlane.xlu0 %141
    %v143 = vmax.f32 %v43, %v44
    %144 = vmax.xlane.f32.xlu0 %v143
    %v145 = vpop.xlane.xlu0 %144
    %v146 = vmax.f32 %v45, %v46
    %147 = vmax.xlane.f32.xlu0 %v146
    %v148 = vpop.xlane.xlu0 %147
    %v149 = vmax.f32 %v47, %v48
    %150 = vmax.xlane.f32.xlu0 %v149
    %v151 = vpop.xlane.xlu0 %150
    %v152 = vmax.f32 %v49, %v50
    %153 = vmax.xlane.f32.xlu0 %v152
    %v154 = vpop.xlane.xlu0 %153
    %v155 = vmax.f32 %v51, %v52
    %156 = vmax.xlane.f32.xlu0 %v155
    %v157 = vpop.xlane.xlu0 %156
    %v158 = vmax.f32 %v53, %v54
    %159 = vmax.xlane.f32.xlu0 %v158
    %v160 = vpop.xlane.xlu0 %159
    %v161 = vmax.f32 %v55, %v56
    %162 = vmax.xlane.f32.xlu0 %v161
    %v163 = vpop.xlane.xlu0 %162
    %v164 = vmax.f32 %v57, %v58
    %165 = vmax.xlane.f32.xlu0 %v164
    %v166 = vpop.xlane.xlu0 %165
    %v167 = vmax.f32 %v59, %v60
    %168 = vmax.xlane.f32.xlu0 %v167
    %v169 = vpop.xlane.xlu0 %168
    %v170 = vmax.f32 %v61, %v62
    %171 = vmax.xlane.f32.xlu0 %v170
    %v172 = vpop.xlane.xlu0 %171
    %v173 = vmax.f32 %v63, %v64
    %174 = vmax.xlane.f32.xlu0 %v173
    %v175 = vpop.xlane.xlu0 %174
    %v176 = vmax.f32 %v65, %v66
    %177 = vmax.xlane.f32.xlu0 %v176
    %v178 = vpop.xlane.xlu0 %177
    %v179 = vld [vmem:[%s1] sm:$0xff]
    %v180 = vld [vmem:[%s1 + $0x8] sm:$0xff]
    %v181 = vld [vmem:[%s1 + $0x10] sm:$0xff]
    %v182 = vld [vmem:[%s1 + $0x18] sm:$0xff]
    %v183 = vld [vmem:[%s2] sm:$0x1]
    %v185 = vlaneseq
    %v186 = vshrl.u32 %v185, 7
    %v187 = vsub.s32 0, %v186
    %v188 = vrot.slane %v183, %v187
    %v206 = vlaneseq
    %v207 = vand.u32 %v206, 127
    %v208 = vlaneseq
    %v209 = vshrl.u32 %v208, 7
    %v210 = vsub.s32 %v207, %v209
    %v211 = vrot.slane %v115, %v210
    %v212 = vadd.s32 %v207, 4294967288
    %v213 = vlaneseq
    %v214 = vshrl.u32 %v213, 7
    %v215 = vsub.s32 %v212, %v214
    %v216 = vrot.slane %v116, %v215
    %vm217 = vcmask 130112
    %v218 = vsel %vm217, %v216, %v211
    %v219 = vadd.s32 %v207, 4294967280
    %v220 = vlaneseq
    %v221 = vshrl.u32 %v220, 7
    %v222 = vsub.s32 %v219, %v221
    %v223 = vrot.slane %v117, %v222
    %vm224 = vcmask 195712
    %v225 = vsel %vm224, %v223, %v218
    %v226 = vadd.s32 %v207, 4294967272
    %v227 = vlaneseq
    %v228 = vshrl.u32 %v227, 7
    %v229 = vsub.s32 %v226, %v228
    %v230 = vrot.slane %v118, %v229
    %vm231 = vcmask 261312
    %v232 = vsel %vm231, %v230, %v225
    %v233 = vlaneseq
    %v234 = vshrl.u32 %v233, 7
    %v235 = vsub.s32 %v207, %v234
    %v236 = vrot.slane %v119, %v235
    %v237 = vlaneseq
    %v238 = vshrl.u32 %v237, 7
    %v239 = vsub.s32 %v212, %v238
    %v240 = vrot.slane %v120, %v239
    %v241 = vsel %vm217, %v240, %v236
    %v242 = vlaneseq
    %v243 = vshrl.u32 %v242, 7
    %v244 = vsub.s32 %v219, %v243
    %v245 = vrot.slane %v121, %v244
    %v246 = vsel %vm224, %v245, %v241
    %v247 = vlaneseq
    %v248 = vshrl.u32 %v247, 7
    %v249 = vsub.s32 %v226, %v248
    %v250 = vrot.slane %v122, %v249
    %v251 = vsel %vm231, %v250, %v246
    %v252 = vlaneseq
    %v253 = vshrl.u32 %v252, 7
    %v254 = vsub.s32 %v207, %v253
    %v255 = vrot.slane %v123, %v254
    %v256 = vlaneseq
    %v257 = vshrl.u32 %v256, 7
    %v258 = vsub.s32 %v212, %v257
    %v259 = vrot.slane %v124, %v258
    %v260 = vsel %vm217, %v259, %v255
    %v261 = vlaneseq
    %v262 = vshrl.u32 %v261, 7
    %v263 = vsub.s32 %v219, %v262
    %v264 = vrot.slane %v125, %v263
    %v265 = vsel %vm224, %v264, %v260
    %v266 = vlaneseq
    %v267 = vshrl.u32 %v266, 7
    %v268 = vsub.s32 %v226, %v267
    %v269 = vrot.slane %v126, %v268
    %v270 = vsel %vm231, %v269, %v265
    %v271 = vlaneseq
    %v272 = vshrl.u32 %v271, 7
    %v273 = vsub.s32 %v207, %v272
    %v274 = vrot.slane %v127, %v273
    %v275 = vlaneseq
    %v276 = vshrl.u32 %v275, 7
    %v277 = vsub.s32 %v212, %v276
    %v278 = vrot.slane %v128, %v277
    %v279 = vsel %vm217, %v278, %v274
    %v280 = vlaneseq
    %v281 = vshrl.u32 %v280, 7
    %v282 = vsub.s32 %v219, %v281
    %v283 = vrot.slane %v129, %v282
    %v284 = vsel %vm224, %v283, %v279
    %v285 = vlaneseq
    %v286 = vshrl.u32 %v285, 7
    %v287 = vsub.s32 %v226, %v286
    %v288 = vrot.slane %v130, %v287
    %v289 = vsel %vm231, %v288, %v284
    %vm290 = vcmask 1041409
    %v291 = vsel %vm290, %v251, %v232
    %vm292 = vcmask 1042434
    %v293 = vsel %vm292, %v270, %v291
    %vm294 = vcmask 1043459
    %v295 = vsel %vm294, %v289, %v293
    %vm296 = vcmask 261120
    %v297 = vsel %vm296, %v295, 0
    %299 = vmatprep.subr.mxu0 0.0
    %300 = vmatpush1.msra.mxu0 0.0
    %301 = vmatprep.subr.mxu0 0.0
    %302 = vmatpush1.msra.mxu0 0.0
    %303 = vmatprep.subr.mxu0 0.0
    %304 = vmatpush1.msra.mxu0 0.0
    %305 = vmatprep.subr.mxu0 0.0
    %306 = vmatpush1.msra.mxu0 0.0
    %307 = vmatprep.subr.mxu0 0.0
    %308 = vmatpush1.msra.mxu0 0.0
    %309 = vmatprep.subr.mxu0 0.0
    %310 = vmatpush1.msra.mxu0 0.0
    %311 = vmatprep.subr.mxu0 0.0
    %312 = vmatpush1.msra.mxu0 0.0
    %313 = vmatprep.subr.mxu0 0.0
    %314 = vmatpush1.msra.mxu0 0.0
    %315 = vmatprep.subr.mxu0 0.0
    %316 = vmatpush1.msra.mxu0 0.0
    %317 = vmatprep.subr.mxu0 0.0
    %318 = vmatpush1.msra.mxu0 0.0
    %319 = vmatprep.subr.mxu0 0.0
    %320 = vmatpush1.msra.mxu0 0.0
    %321 = vmatprep.subr.mxu0 0.0
    %322 = vmatpush1.msra.mxu0 0.0
    %323 = vmatprep.subr.mxu0 0.0
    %324 = vmatpush1.msra.mxu0 %v182
    %325 = vmatprep.subr.mxu0 0.0
    %326 = vmatpush1.msra.mxu0 %v181
    %327 = vmatprep.subr.mxu0 0.0
    %328 = vmatpush1.msra.mxu0 %v180
    %329 = vmatprep.subr.mxu0 0.0
    %330 = vmatpush1.msra.mxu0 %v179
    %331 = vmatprep.subr.mxu0 0.0
    %332 = vmatpush2.msra.mxu0 0.0
    %333 = vmatprep.subr.mxu0 0.0
    %334 = vmatpush2.msra.mxu0 0.0
    %335 = vmatprep.subr.mxu0 0.0
    %336 = vmatpush2.msra.mxu0 0.0
    %337 = vmatprep.subr.mxu0 0.0
    %338 = vmatpush2.msra.mxu0 0.0
    %339 = vmatprep.subr.mxu0 0.0
    %340 = vmatpush2.msra.mxu0 0.0
    %341 = vmatprep.subr.mxu0 0.0
    %342 = vmatpush2.msra.mxu0 0.0
    %343 = vmatprep.subr.mxu0 0.0
    %344 = vmatpush2.msra.mxu0 0.0
    %345 = vmatprep.subr.mxu0 0.0
    %346 = vmatpush2.msra.mxu0 0.0
    %347 = vmatprep.subr.mxu0 0.0
    %348 = vmatpush2.msra.mxu0 0.0
    %349 = vmatprep.subr.mxu0 0.0
    %350 = vmatpush2.msra.mxu0 0.0
    %351 = vmatprep.subr.mxu0 0.0
    %352 = vmatpush2.msra.mxu0 0.0
    %353 = vmatprep.subr.mxu0 0.0
    %354 = vmatpush2.msra.mxu0 0.0
    %355 = vmatprep.subr.mxu0 0.0
    %356 = vmatpush2.msra.mxu0 0.0
    %357 = vmatprep.subr.mxu0 0.0
    %358 = vmatpush2.msra.mxu0 0.0
    %359 = vmatprep.subr.mxu0 0.0
    %360 = vmatpush2.msra.mxu0 0.0
    %361 = vmatprep.subr.mxu0 0.0
    %362 = vmatpush2.msra.mxu0 0.0
    %363 = vmatprep.mubr.f32.mxu0 0.0
    %364 = vmatmul.mubr.f32.gmra.mxu0 %v297
    %v365 = vpop.f32.mrf.mxu0
    %v366 = vadd.f32 %v188, %v365
    %v367 = vpop.f32.mrf.mxu0
    %368 = vdwg.mxu0
    %v369 = vmax.f32 %v366, 0.0
    %v370 = vld [vmem:[%s3] sm:$0x3]
    %v371 = vld [vmem:[%s4] sm:$0x1]
    %v373 = vlaneseq
    %v374 = vshrl.u32 %v373, 7
    %v375 = vsub.s32 0, %v374
    %v376 = vrot.slane %v371, %v375
    %vm378 = vcmask 15360
    %v380 = vsel %vm378, %v369, 0
    %vm382 = vcmask 1041408
    %v384 = vsel %vm382, %v370, 0
    %386 = vmatprep.subr.mxu0 0.0
    %387 = vmatpush1.msra.mxu0 0.0
    %388 = vmatprep.subr.mxu0 0.0
    %389 = vmatpush1.msra.mxu0 0.0
    %390 = vmatprep.subr.mxu0 0.0
    %391 = vmatpush1.msra.mxu0 0.0
    %392 = vmatprep.subr.mxu0 0.0
    %393 = vmatpush1.msra.mxu0 0.0
    %394 = vmatprep.subr.mxu0 0.0
    %395 = vmatpush1.msra.mxu0 0.0
    %396 = vmatprep.subr.mxu0 0.0
    %397 = vmatpush1.msra.mxu0 0.0
    %398 = vmatprep.subr.mxu0 0.0
    %399 = vmatpush1.msra.mxu0 0.0
    %400 = vmatprep.subr.mxu0 0.0
    %401 = vmatpush1.msra.mxu0 0.0
    %402 = vmatprep.subr.mxu0 0.0
    %403 = vmatpush1.msra.mxu0 0.0
    %404 = vmatprep.subr.mxu0 0.0
    %405 = vmatpush1.msra.mxu0 0.0
    %406 = vmatprep.subr.mxu0 0.0
    %407 = vmatpush1.msra.mxu0 0.0
    %408 = vmatprep.subr.mxu0 0.0
    %409 = vmatpush1.msra.mxu0 0.0
    %410 = vmatprep.subr.mxu0 0.0
    %411 = vmatpush1.msra.mxu0 0.0
    %412 = vmatprep.subr.mxu0 0.0
    %413 = vmatpush1.msra.mxu0 0.0
    %414 = vmatprep.subr.mxu0 0.0
    %415 = vmatpush1.msra.mxu0 0.0
    %416 = vmatprep.subr.mxu0 0.0
    %417 = vmatpush1.msra.mxu0 %v384
    %418 = vmatprep.subr.mxu0 0.0
    %419 = vmatpush2.msra.mxu0 0.0
    %420 = vmatprep.subr.mxu0 0.0
    %421 = vmatpush2.msra.mxu0 0.0
    %422 = vmatprep.subr.mxu0 0.0
    %423 = vmatpush2.msra.mxu0 0.0
    %424 = vmatprep.subr.mxu0 0.0
    %425 = vmatpush2.msra.mxu0 0.0
    %426 = vmatprep.subr.mxu0 0.0
    %427 = vmatpush2.msra.mxu0 0.0
    %428 = vmatprep.subr.mxu0 0.0
    %429 = vmatpush2.msra.mxu0 0.0
    %430 = vmatprep.subr.mxu0 0.0
    %431 = vmatpush2.msra.mxu0 0.0
    %432 = vmatprep.subr.mxu0 0.0
    %433 = vmatpush2.msra.mxu0 0.0
    %434 = vmatprep.subr.mxu0 0.0
    %435 = vmatpush2.msra.mxu0 0.0
    %436 = vmatprep.subr.mxu0 0.0
    %437 = vmatpush2.msra.mxu0 0.0
    %438 = vmatprep.subr.mxu0 0.0
    %439 = vmatpush2.msra.mxu0 0.0
    %440 = vmatprep.subr.mxu0 0.0
    %441 = vmatpush2.msra.mxu0 0.0
    %442 = vmatprep.subr.mxu0 0.0
    %443 = vmatpush2.msra.mxu0 0.0
    %444 = vmatprep.subr.mxu0 0.0
    %445 = vmatpush2.msra.mxu0 0.0
    %446 = vmatprep.subr.mxu0 0.0
    %447 = vmatpush2.msra.mxu0 0.0
    %448 = vmatprep.subr.mxu0 0.0
    %449 = vmatpush2.msra.mxu0 0.0
    %450 = vmatprep.mubr.f32.mxu0 0.0
    %451 = vmatmul.mubr.f32.gmra.mxu0 %v380
    %v452 = vpop.f32.mrf.mxu0
    %v453 = vadd.f32 %v376, %v452
    %v454 = vpop.f32.mrf.mxu0
    %455 = vdwg.mxu0
    %v472 = vlaneseq
    %v473 = vshrl.u32 %v472, 7
    %v474 = vsub.s32 %v207, %v473
    %v475 = vrot.slane %v133, %v474
    %v476 = vlaneseq
    %v477 = vshrl.u32 %v476, 7
    %v478 = vsub.s32 %v212, %v477
    %v479 = vrot.slane %v136, %v478
    %v480 = vsel %vm217, %v479, %v475
    %v481 = vlaneseq
    %v482 = vshrl.u32 %v481, 7
    %v483 = vsub.s32 %v219, %v482
    %v484 = vrot.slane %v139, %v483
    %v485 = vsel %vm224, %v484, %v480
    %v486 = vlaneseq
    %v487 = vshrl.u32 %v486, 7
    %v488 = vsub.s32 %v226, %v487
    %v489 = vrot.slane %v142, %v488
    %v490 = vsel %vm231, %v489, %v485
    %v491 = vlaneseq
    %v492 = vshrl.u32 %v491, 7
    %v493 = vsub.s32 %v207, %v492
    %v494 = vrot.slane %v145, %v493
    %v495 = vlaneseq
    %v496 = vshrl.u32 %v495, 7
    %v497 = vsub.s32 %v212, %v496
    %v498 = vrot.slane %v148, %v497
    %v499 = vsel %vm217, %v498, %v494
    %v500 = vlaneseq
    %v501 = vshrl.u32 %v500, 7
    %v502 = vsub.s32 %v219, %v501
    %v503 = vrot.slane %v151, %v502
    %v504 = vsel %vm224, %v503, %v499
    %v505 = vlaneseq
    %v506 = vshrl.u32 %v505, 7
    %v507 = vsub.s32 %v226, %v506
    %v508 = vrot.slane %v154, %v507
    %v509 = vsel %vm231, %v508, %v504
    %v510 = vlaneseq
    %v511 = vshrl.u32 %v510, 7
    %v512 = vsub.s32 %v207, %v511
    %v513 = vrot.slane %v157, %v512
    %v514 = vlaneseq
    %v515 = vshrl.u32 %v514, 7
    %v516 = vsub.s32 %v212, %v515
    %v517 = vrot.slane %v160, %v516
    %v518 = vsel %vm217, %v517, %v513
    %v519 = vlaneseq
    %v520 = vshrl.u32 %v519, 7
    %v521 = vsub.s32 %v219, %v520
    %v522 = vrot.slane %v163, %v521
    %v523 = vsel %vm224, %v522, %v518
    %v524 = vlaneseq
    %v525 = vshrl.u32 %v524, 7
    %v526 = vsub.s32 %v226, %v525
    %v527 = vrot.slane %v166, %v526
    %v528 = vsel %vm231, %v527, %v523
    %v529 = vlaneseq
    %v530 = vshrl.u32 %v529, 7
    %v531 = vsub.s32 %v207, %v530
    %v532 = vrot.slane %v169, %v531
    %v533 = vlaneseq
    %v534 = vshrl.u32 %v533, 7
    %v535 = vsub.s32 %v212, %v534
    %v536 = vrot.slane %v172, %v535
    %v537 = vsel %vm217, %v536, %v532
    %v538 = vlaneseq
    %v539 = vshrl.u32 %v538, 7
    %v540 = vsub.s32 %v219, %v539
    %v541 = vrot.slane %v175, %v540
    %v542 = vsel %vm224, %v541, %v537
    %v543 = vlaneseq
    %v544 = vshrl.u32 %v543, 7
    %v545 = vsub.s32 %v226, %v544
    %v546 = vrot.slane %v178, %v545
    %v547 = vsel %vm231, %v546, %v542
    %v548 = vsel %vm290, %v509, %v490
    %v549 = vsel %vm292, %v528, %v548
    %v550 = vsel %vm294, %v547, %v549
    %v551 = vsel %vm296, %v550, 0
    %553 = vmatprep.subr.mxu0 0.0
    %554 = vmatpush1.msra.mxu0 0.0
    %555 = vmatprep.subr.mxu0 0.0
    %556 = vmatpush1.msra.mxu0 0.0
    %557 = vmatprep.subr.mxu0 0.0
    %558 = vmatpush1.msra.mxu0 0.0
    %559 = vmatprep.subr.mxu0 0.0
    %560 = vmatpush1.msra.mxu0 0.0
    %561 = vmatprep.subr.mxu0 0.0
    %562 = vmatpush1.msra.mxu0 0.0
    %563 = vmatprep.subr.mxu0 0.0
    %564 = vmatpush1.msra.mxu0 0.0
    %565 = vmatprep.subr.mxu0 0.0
    %566 = vmatpush1.msra.mxu0 0.0
    %567 = vmatprep.subr.mxu0 0.0
    %568 = vmatpush1.msra.mxu0 0.0
    %569 = vmatprep.subr.mxu0 0.0
    %570 = vmatpush1.msra.mxu0 0.0
    %571 = vmatprep.subr.mxu0 0.0
    %572 = vmatpush1.msra.mxu0 0.0
    %573 = vmatprep.subr.mxu0 0.0
    %574 = vmatpush1.msra.mxu0 0.0
    %575 = vmatprep.subr.mxu0 0.0
    %576 = vmatpush1.msra.mxu0 0.0
    %577 = vmatprep.subr.mxu0 0.0
    %578 = vmatpush1.msra.mxu0 %v182
    %579 = vmatprep.subr.mxu0 0.0
    %580 = vmatpush1.msra.mxu0 %v181
    %581 = vmatprep.subr.mxu0 0.0
    %582 = vmatpush1.msra.mxu0 %v180
    %583 = vmatprep.subr.mxu0 0.0
    %584 = vmatpush1.msra.mxu0 %v179
    %585 = vmatprep.subr.mxu0 0.0
    %586 = vmatpush2.msra.mxu0 0.0
    %587 = vmatprep.subr.mxu0 0.0
    %588 = vmatpush2.msra.mxu0 0.0
    %589 = vmatprep.subr.mxu0 0.0
    %590 = vmatpush2.msra.mxu0 0.0
    %591 = vmatprep.subr.mxu0 0.0
    %592 = vmatpush2.msra.mxu0 0.0
    %593 = vmatprep.subr.mxu0 0.0
    %594 = vmatpush2.msra.mxu0 0.0
    %595 = vmatprep.subr.mxu0 0.0
    %596 = vmatpush2.msra.mxu0 0.0
    %597 = vmatprep.subr.mxu0 0.0
    %598 = vmatpush2.msra.mxu0 0.0
    %599 = vmatprep.subr.mxu0 0.0
    %600 = vmatpush2.msra.mxu0 0.0
    %601 = vmatprep.subr.mxu0 0.0
    %602 = vmatpush2.msra.mxu0 0.0
    %603 = vmatprep.subr.mxu0 0.0
    %604 = vmatpush2.msra.mxu0 0.0
    %605 = vmatprep.subr.mxu0 0.0
    %606 = vmatpush2.msra.mxu0 0.0
    %607 = vmatprep.subr.mxu0 0.0
    %608 = vmatpush2.msra.mxu0 0.0
    %609 = vmatprep.subr.mxu0 0.0
    %610 = vmatpush2.msra.mxu0 0.0
    %611 = vmatprep.subr.mxu0 0.0
    %612 = vmatpush2.msra.mxu0 0.0
    %613 = vmatprep.subr.mxu0 0.0
    %614 = vmatpush2.msra.mxu0 0.0
    %615 = vmatprep.subr.mxu0 0.0
    %616 = vmatpush2.msra.mxu0 0.0
    %617 = vmatprep.mubr.f32.mxu0 0.0
    %618 = vmatmul.mubr.f32.gmra.mxu0 %v551
    %v619 = vpop.f32.mrf.mxu0
    %v620 = vadd.f32 %v188, %v619
    %v621 = vpop.f32.mrf.mxu0
    %622 = vdwg.mxu0
    %v623 = vmax.f32 %v620, 0.0
    %v625 = vsel %vm378, %v623, 0
    %627 = vmatprep.subr.mxu0 0.0
    %628 = vmatpush1.msra.mxu0 0.0
    %629 = vmatprep.subr.mxu0 0.0
    %630 = vmatpush1.msra.mxu0 0.0
    %631 = vmatprep.subr.mxu0 0.0
    %632 = vmatpush1.msra.mxu0 0.0
    %633 = vmatprep.subr.mxu0 0.0
    %634 = vmatpush1.msra.mxu0 0.0
    %635 = vmatprep.subr.mxu0 0.0
    %636 = vmatpush1.msra.mxu0 0.0
    %637 = vmatprep.subr.mxu0 0.0
    %638 = vmatpush1.msra.mxu0 0.0
    %639 = vmatprep.subr.mxu0 0.0
    %640 = vmatpush1.msra.mxu0 0.0
    %641 = vmatprep.subr.mxu0 0.0
    %642 = vmatpush1.msra.mxu0 0.0
    %643 = vmatprep.subr.mxu0 0.0
    %644 = vmatpush1.msra.mxu0 0.0
    %645 = vmatprep.subr.mxu0 0.0
    %646 = vmatpush1.msra.mxu0 0.0
    %647 = vmatprep.subr.mxu0 0.0
    %648 = vmatpush1.msra.mxu0 0.0
    %649 = vmatprep.subr.mxu0 0.0
    %650 = vmatpush1.msra.mxu0 0.0
    %651 = vmatprep.subr.mxu0 0.0
    %652 = vmatpush1.msra.mxu0 0.0
    %653 = vmatprep.subr.mxu0 0.0
    %654 = vmatpush1.msra.mxu0 0.0
    %655 = vmatprep.subr.mxu0 0.0
    %656 = vmatpush1.msra.mxu0 0.0
    %657 = vmatprep.subr.mxu0 0.0
    %658 = vmatpush1.msra.mxu0 %v384
    %659 = vmatprep.subr.mxu0 0.0
    %660 = vmatpush2.msra.mxu0 0.0
    %661 = vmatprep.subr.mxu0 0.0
    %662 = vmatpush2.msra.mxu0 0.0
    %663 = vmatprep.subr.mxu0 0.0
    %664 = vmatpush2.msra.mxu0 0.0
    %665 = vmatprep.subr.mxu0 0.0
    %666 = vmatpush2.msra.mxu0 0.0
    %667 = vmatprep.subr.mxu0 0.0
    %668 = vmatpush2.msra.mxu0 0.0
    %669 = vmatprep.subr.mxu0 0.0
    %670 = vmatpush2.msra.mxu0 0.0
    %671 = vmatprep.subr.mxu0 0.0
    %672 = vmatpush2.msra.mxu0 0.0
    %673 = vmatprep.subr.mxu0 0.0
    %674 = vmatpush2.msra.mxu0 0.0
    %675 = vmatprep.subr.mxu0 0.0
    %676 = vmatpush2.msra.mxu0 0.0
    %677 = vmatprep.subr.mxu0 0.0
    %678 = vmatpush2.msra.mxu0 0.0
    %679 = vmatprep.subr.mxu0 0.0
    %680 = vmatpush2.msra.mxu0 0.0
    %681 = vmatprep.subr.mxu0 0.0
    %682 = vmatpush2.msra.mxu0 0.0
    %683 = vmatprep.subr.mxu0 0.0
    %684 = vmatpush2.msra.mxu0 0.0
    %685 = vmatprep.subr.mxu0 0.0
    %686 = vmatpush2.msra.mxu0 0.0
    %687 = vmatprep.subr.mxu0 0.0
    %688 = vmatpush2.msra.mxu0 0.0
    %689 = vmatprep.subr.mxu0 0.0
    %690 = vmatpush2.msra.mxu0 0.0
    %691 = vmatprep.mubr.f32.mxu0 0.0
    %692 = vmatmul.mubr.f32.gmra.mxu0 %v625
    %v693 = vpop.f32.mrf.mxu0
    %v694 = vadd.f32 %v376, %v693
    %v695 = vpop.f32.mrf.mxu0
    %696 = vdwg.mxu0
    %v697 = vadd.f32 %v453, %v694
    %v698 = vxor.u32 %v697, 2147483648
    %v699 = vmul.f32 %v698, 1.442695
    %v700 = vpow.pop %v699
    %v701 = vadd.f32 %v700, 1.0
    %v702 = vrcp.pop %v701
    %v703 = vmul.f32 1.0, %v702
    %v704 = vlaneseq
    %v705 = vshrl.u32 %v704, 7
    %v706 = vsub.s32 0, %v705
    %v707 = vrot.slane %v703, %v706
    %709 = vbcast.lane.b32.xlu0 %v707, 256
    %v710 = vpop.permute.xlu0 %709
    %s712 = sor.u32 256, 8
    %713 = vbcast.lane.b32.xlu0 %v707, %s712
    %v714 = vpop.permute.xlu0 %713
    %s716 = sor.u32 256, 16
    %717 = vbcast.lane.b32.xlu0 %v707, %s716
    %v718 = vpop.permute.xlu0 %717
    %s720 = sor.u32 256, 24
    %721 = vbcast.lane.b32.xlu0 %v707, %s720
    %v722 = vpop.permute.xlu0 %721
    %v723 = vlaneseq
    %v724 = vshrl.u32 %v723, 7
    %v725 = vsub.s32 1, %v724
    %v726 = vrot.slane %v703, %v725
    %728 = vbcast.lane.b32.xlu0 %v726, 256
    %v729 = vpop.permute.xlu0 %728
    %s731 = sor.u32 256, 8
    %732 = vbcast.lane.b32.xlu0 %v726, %s731
    %v733 = vpop.permute.xlu0 %732
    %s735 = sor.u32 256, 16
    %736 = vbcast.lane.b32.xlu0 %v726, %s735
    %v737 = vpop.permute.xlu0 %736
    %s739 = sor.u32 256, 24
    %740 = vbcast.lane.b32.xlu0 %v726, %s739
    %v741 = vpop.permute.xlu0 %740
    %v742 = vlaneseq
    %v743 = vshrl.u32 %v742, 7
    %v744 = vsub.s32 2, %v743
    %v745 = vrot.slane %v703, %v744
    %747 = vbcast.lane.b32.xlu0 %v745, 256
    %v748 = vpop.permute.xlu0 %747
    %s750 = sor.u32 256, 8
    %751 = vbcast.lane.b32.xlu0 %v745, %s750
    %v752 = vpop.permute.xlu0 %751
    %s754 = sor.u32 256, 16
    %755 = vbcast.lane.b32.xlu0 %v745, %s754
    %v756 = vpop.permute.xlu0 %755
    %s758 = sor.u32 256, 24
    %759 = vbcast.lane.b32.xlu0 %v745, %s758
    %v760 = vpop.permute.xlu0 %759
    %v761 = vlaneseq
    %v762 = vshrl.u32 %v761, 7
    %v763 = vsub.s32 3, %v762
    %v764 = vrot.slane %v703, %v763
    %766 = vbcast.lane.b32.xlu0 %v764, 256
    %v767 = vpop.permute.xlu0 %766
    %s769 = sor.u32 256, 8
    %770 = vbcast.lane.b32.xlu0 %v764, %s769
    %v771 = vpop.permute.xlu0 %770
    %s773 = sor.u32 256, 16
    %774 = vbcast.lane.b32.xlu0 %v764, %s773
    %v775 = vpop.permute.xlu0 %774
    %s777 = sor.u32 256, 24
    %778 = vbcast.lane.b32.xlu0 %v764, %s777
    %v779 = vpop.permute.xlu0 %778
    %v780 = vmul.f32 %v35, %v710
    %v781 = vmul.f32 %v36, %v710
    %v782 = vmul.f32 %v37, %v714
    %v783 = vmul.f32 %v38, %v714
    %v784 = vmul.f32 %v39, %v718
    %v785 = vmul.f32 %v40, %v718
    %v786 = vmul.f32 %v41, %v722
    %v787 = vmul.f32 %v42, %v722
    %v788 = vmul.f32 %v43, %v729
    %v789 = vmul.f32 %v44, %v729
    %v790 = vmul.f32 %v45, %v733
    %v791 = vmul.f32 %v46, %v733
    %v792 = vmul.f32 %v47, %v737
    %v793 = vmul.f32 %v48, %v737
    %v794 = vmul.f32 %v49, %v741
    %v795 = vmul.f32 %v50, %v741
    %v796 = vmul.f32 %v51, %v748
    %v797 = vmul.f32 %v52, %v748
    %v798 = vmul.f32 %v53, %v752
    %v799 = vmul.f32 %v54, %v752
    %v800 = vmul.f32 %v55, %v756
    %v801 = vmul.f32 %v56, %v756
    %v802 = vmul.f32 %v57, %v760
    %v803 = vmul.f32 %v58, %v760
    %v804 = vmul.f32 %v59, %v767
    %v805 = vmul.f32 %v60, %v767
    %v806 = vmul.f32 %v61, %v771
    %v807 = vmul.f32 %v62, %v771
    %v808 = vmul.f32 %v63, %v775
    %v809 = vmul.f32 %v64, %v775
    %v810 = vmul.f32 %v65, %v779
    %v811 = vmul.f32 %v66, %v779
    %812 = vst [vmem:[#allocation5] sm:$0xff] %v780
    %813 = vst [vmem:[#allocation5 + $0x8] sm:$0xff] %v781
    %814 = vst [vmem:[#allocation5 + $0x10] sm:$0xff] %v782
    %815 = vst [vmem:[#allocation5 + $0x18] sm:$0xff] %v783
    %816 = vst [vmem:[#allocation5 + $0x20] sm:$0xff] %v784
    %817 = vst [vmem:[#allocation5 + $0x28] sm:$0xff] %v785
    %818 = vst [vmem:[#allocation5 + $0x30] sm:$0xff] %v786
    %819 = vst [vmem:[#allocation5 + $0x38] sm:$0xff] %v787
    %820 = vst [vmem:[#allocation5 + $0x40] sm:$0xff] %v788
    %821 = vst [vmem:[#allocation5 + $0x48] sm:$0xff] %v789
    %822 = vst [vmem:[#allocation5 + $0x50] sm:$0xff] %v790
    %823 = vst [vmem:[#allocation5 + $0x58] sm:$0xff] %v791
    %824 = vst [vmem:[#allocation5 + $0x60] sm:$0xff] %v792
    %825 = vst [vmem:[#allocation5 + $0x68] sm:$0xff] %v793
    %826 = vst [vmem:[#allocation5 + $0x70] sm:$0xff] %v794
    %827 = vst [vmem:[#allocation5 + $0x78] sm:$0xff] %v795
    %828 = vst [vmem:[#allocation5 + $0x80] sm:$0xff] %v796
    %829 = vst [vmem:[#allocation5 + $0x88] sm:$0xff] %v797
    %830 = vst [vmem:[#allocation5 + $0x90] sm:$0xff] %v798
    %831 = vst [vmem:[#allocation5 + $0x98] sm:$0xff] %v799
    %832 = vst [vmem:[#allocation5 + $0xa0] sm:$0xff] %v800
    %833 = vst [vmem:[#allocation5 + $0xa8] sm:$0xff] %v801
    %834 = vst [vmem:[#allocation5 + $0xb0] sm:$0xff] %v802
    %835 = vst [vmem:[#allocation5 + $0xb8] sm:$0xff] %v803
    %836 = vst [vmem:[#allocation5 + $0xc0] sm:$0xff] %v804
    %837 = vst [vmem:[#allocation5 + $0xc8] sm:$0xff] %v805
    %838 = vst [vmem:[#allocation5 + $0xd0] sm:$0xff] %v806
    %839 = vst [vmem:[#allocation5 + $0xd8] sm:$0xff] %v807
    %840 = vst [vmem:[#allocation5 + $0xe0] sm:$0xff] %v808
    %841 = vst [vmem:[#allocation5 + $0xe8] sm:$0xff] %v809
    %842 = vst [vmem:[#allocation5 + $0xf0] sm:$0xff] %v810
    %843 = vst [vmem:[#allocation5 + $0xf8] sm:$0xff] %v811
    // Predicated region
    $region26: #{tpu_custom_call.1} parent=1 // pred_check
      _
    $region27: #{tpu_custom_call.1} parent=1 // pred_check_branch
      %845 = sbr.rel (0) target = $region29
    $region28: #{tpu_custom_call.1} parent=1 // pred_region
      %s847 = ssub.s32 4096, 4096
      %848 = vsyncadd [#allocation4], %s847
      %s849 = sshll.u32 [#allocation5], 4
      %s850 = int_to_ptr.vmem [resolvable:$true] %s849
      %855 = dma.vmem_to_hbm [thread:$0]  %s850, 4096, %s5, [#allocation4], 256, 256, 16
    $region29: #{tpu_custom_call.1} parent=1 // pred_fallthru
      _
    // Predicated region
    $region30: #{tpu_custom_call.1} parent=1 // pred_check
      _
    $region31: #{tpu_custom_call.1} parent=1 // pred_check_branch
      %857 = sbr.rel (0) target = $region33
    $region32: #{tpu_custom_call.1} parent=1 // pred_region
      %858 = dma.done [#allocation4], 4096
    $region33: #{tpu_custom_call.1} parent=1 // pred_fallthru
      _
    %859 = vsyncpa [#allocation3], 1
    %860 = vsyncpa [#allocation4], 1

</llo_original>
